<compile_context>
chip_gen: v7x
topology: tpu7x:2x2x1
jax: 0.10.0
libtpu: 0.0.40
codegen_flags: <defaults>
</compile_context>

<pallas_src>
import functools

import jax
import jax.numpy as jnp
from jax import lax
from jax.experimental import pallas as pl
from jax.experimental.pallas import tpu as pltpu

LANES = 128            # TPU lane width; table laid out as (8, 128)
TBL_ROWS = 8
N_PARTS = 3            # exact 3-way bf16 split of the f32 table
KMER_COUNT = 4 ** 5    # = 1024 = TBL_ROWS * LANES  (FivemerModel: kmer_length=5)


def _fivemer_kernel(tbl_ref, idx_ref, mask_ref, out_ref, *, sub_rows):
    """rates = exp(table[idx] * mask) for one (block_rows, L) tile.

    tbl_ref : (128, 24) bf16 -- transposed table, column = part*8 + row; the
              f32 table is the exact sum of its 3 bf16 parts.
    idx_ref : (block_rows, L) int32
    mask_ref: (block_rows, L) float32 / int8
    out_ref : (block_rows, L) float32
    """
    block_rows, L = idx_ref.shape
    n_sub = block_rows // sub_rows

    # Tiny (6 KB) table stays VMEM-resident (constant block index); broadcast
    # once per kernel invocation for the batched matmul (hoisted out of loop).
    tbl_b = jnp.broadcast_to(tbl_ref[...], (sub_rows, LANES, N_PARTS * TBL_ROWS))

    def body(i, carry):
        r0 = pl.multiple_of(i * sub_rows, sub_rows)
        idx = idx_ref[pl.ds(r0, sub_rows), :]          # (s, L) int32
        hi = idx >> 7                                  # table row  in [0, 8)
        lo = idx & 0x7F                                # table lane in [0, 128)

        # --- lane select on the MXU: single matmul, K=128, N=24 --------------
        onehot_lo = (
            lo[..., None]
            == lax.broadcasted_iota(jnp.int32, (sub_rows, L, LANES), 2)
        ).astype(jnp.bfloat16)                         # (s, L, 128), exact 0/1
        vals24 = jnp.einsum(
            "slk,skn->sln", onehot_lo, tbl_b,
            preferred_element_type=jnp.float32)        # (s, L, 24)

        # --- exact f32 reconstruction + 8-wide row select on the VPU ---------
        vals8 = (vals24[..., 0:TBL_ROWS]
                 + vals24[..., TBL_ROWS:2 * TBL_ROWS]
                 + vals24[..., 2 * TBL_ROWS:3 * TBL_ROWS])   # (s, L, 8) f32
        onehot_hi = (
            hi[..., None]
            == lax.broadcasted_iota(jnp.int32, (sub_rows, L, TBL_ROWS), 2)
        ).astype(jnp.float32)
        log_rates = jnp.sum(vals8 * onehot_hi, axis=-1)      # (s, L)

        # exp(log_rate * mask); masked positions -> exp(0) = 1 (torch semantics)
        mask = mask_ref[pl.ds(r0, sub_rows), :].astype(jnp.float32)
        out_ref[pl.ds(r0, sub_rows), :] = jnp.exp(log_rates * mask)
        return carry

    lax.fori_loop(0, n_sub, body, None, unroll=True)


def _pack_table(kmer_embedding):
    """(1024, 1) f32 table -> (128, 24) bf16, column = part*8 + row.

    Exact 3-term bf16 decomposition (residual ~2^-24 relative); done once in
    the wrapper on 4 KB of data.
    """
    tbl = kmer_embedding.astype(jnp.float32).reshape(TBL_ROWS, LANES)
    t0 = tbl.astype(jnp.bfloat16)
    r1 = tbl - t0.astype(jnp.float32)
    t1 = r1.astype(jnp.bfloat16)
    r2 = r1 - t1.astype(jnp.float32)
    t2 = r2.astype(jnp.bfloat16)
    parts = jnp.stack([t0, t1, t2], axis=0)                     # (3, 8, 128)
    return parts.transpose(2, 0, 1).reshape(LANES, N_PARTS * TBL_ROWS)  # (128, 24)


@functools.partial(jax.jit, static_argnames=("block_rows", "sub_rows"))
def fivemer_forward(encoded_parents, masks, kmer_embedding,
                    wt_base_modifier=None, *, block_rows=64, sub_rows=8):
    """FivemerModel.forward: rates = exp(kmer_embedding[encoded_parents] * masks).

    wt_base_modifier is accepted for signature fidelity but unused (as in torch).
    block_rows = batch-row tile height (DMA tile); sub_rows = in-kernel compute
    sub-chunk. L (sequence length) is kept whole in the lane dimension.
    """
    del wt_base_modifier
    B, L = encoded_parents.shape
    V, E = kmer_embedding.shape
    assert V == KMER_COUNT and E == 1

    # Batch-row tile: multiple of 8 (sublane tile), or the full batch if small.
    if B <= block_rows:
        block_rows = B
    else:
        block_rows = max(8, (block_rows // 8) * 8)
    if block_rows % sub_rows != 0 or sub_rows % 8 != 0:
        sub_rows = 8 if block_rows % 8 == 0 else block_rows

    tbl_t = _pack_table(kmer_embedding)                 # (128, 24) bf16, 6 KB

    idx = encoded_parents.astype(jnp.int32)
    if masks.dtype == jnp.bool_:
        masks = masks.astype(jnp.int8)                  # 1 B/pos of HBM traffic

    grid = (pl.cdiv(B, block_rows),)
    kernel = functools.partial(_fivemer_kernel, sub_rows=sub_rows)

    return pl.pallas_call(
        kernel,
        out_shape=jax.ShapeDtypeStruct((B, L), jnp.float32),
        grid=grid,
        in_specs=[
            # tiny table: constant block index -> stays resident in VMEM
            pl.BlockSpec((LANES, N_PARTS * TBL_ROWS), lambda i: (0, 0)),
            pl.BlockSpec((block_rows, L), lambda i: (i, 0)),
            pl.BlockSpec((block_rows, L), lambda i: (i, 0)),
        ],
        out_specs=pl.BlockSpec((block_rows, L), lambda i: (i, 0)),
        compiler_params=pltpu.CompilerParams(
            # "parallel" -> megacore sharding where available.
            # TODO(synk): verify dual-TC sharding on v7x; fall back to
            #             pltpu.CORE_PARALLEL / core_map if it does not split.
            dimension_semantics=("parallel",),
            vmem_limit_bytes=32 * 1024 * 1024,          # safe on v5e/v6e/v7x
        ),
        cost_estimate=pl.CostEstimate(
            flops=B * L * (2 * LANES * N_PARTS * TBL_ROWS + 4 * TBL_ROWS),
            transcendentals=B * L,
            bytes_accessed=B * L * (4 + masks.dtype.itemsize + 4)
            + LANES * N_PARTS * TBL_ROWS * 2,
        ),
    )(tbl_t, idx, masks)


def _reference_forward(encoded_parents, masks, kmer_embedding):
    """Pure-JAX reference of FivemerModel.forward (exact gather)."""
    log_rates = jnp.take(kmer_embedding[:, 0], encoded_parents, axis=0)
    return jnp.exp(log_rates * masks.astype(jnp.float32))


if __name__ == "__main__":
    key = jax.random.PRNGKey(0)
    k_emb, k_idx, k_mask = jax.random.split(key, 3)

    B, L = 2, 16
    # nn.Embedding(kmer_count, 1) default init: N(0, 1)
    kmer_embedding = jax.random.normal(k_emb, (KMER_COUNT, 1), jnp.float32)
    encoded_parents = jax.random.randint(k_idx, (B, L), 0, KMER_COUNT,
                                         dtype=jnp.int32)
    masks = (jax.random.uniform(k_mask, (B, L)) > 0.1).astype(jnp.float32)

    rates = fivemer_forward(encoded_parents, masks, kmer_embedding)
    jax.block_until_ready(rates)

    ref = _reference_forward(encoded_parents, masks, kmer_embedding)
    assert rates.shape == (B, L)
    assert rates.dtype == jnp.float32
    err = jnp.max(jnp.abs(rates - ref))
    assert jnp.allclose(rates, ref, rtol=1e-5, atol=1e-5), (
        f"mismatch vs reference, max abs err {err}")

    print("KERNEL_OK")
</pallas_src>

<mosaic_0001>
module attributes {stable_mosaic.version = 11 : i64} {
  func.func @_fivemer_kernel(%arg0: i32, %arg1: memref<128x24xbf16, #tpu.memory_space<vmem>>, %arg2: memref<2x16xi32, #tpu.memory_space<vmem>>, %arg3: memref<2x16xf32, #tpu.memory_space<vmem>>, %arg4: memref<2x16xf32, #tpu.memory_space<vmem>>) attributes {dimension_semantics = [#tpu.dimension_semantics<parallel>], iteration_bounds = array<i64: 1>, scalar_prefetch = 0 : i64, scratch_operands = 0 : i64, tpu.core_type = #tpu.core_type<tc>, window_params = [{pipeline_mode = #tpu.pipeline_mode<synchronous>, transform_indices = @transform_0, window_bounds = array<i64: 128, 24>}, {transform_indices = @transform_1, window_bounds = array<i64: 2, 16>}, {transform_indices = @transform_2, window_bounds = array<i64: 2, 16>}, {transform_indices = @transform_3, window_bounds = array<i64: 2, 16>}]} {
    %c0 = arith.constant 0 : index
    %c0_0 = arith.constant 0 : index
    %0 = vector.load %arg1[%c0, %c0_0] : memref<128x24xbf16, #tpu.memory_space<vmem>>, vector<128x24xbf16>
    %1 = vector.shape_cast %0 : vector<128x24xbf16> to vector<1x128x24xbf16>
    %2 = vector.broadcast %1 : vector<1x128x24xbf16> to vector<2x128x24xbf16>
    %c0_i32 = arith.constant 0 : i32
    %c2_i32 = arith.constant 2 : i32
    %3 = arith.muli %c0_i32, %c2_i32 : i32
    %4 = tpu.assume_multiple %3, 2 : i32
    %5 = arith.index_cast %4 : i32 to index
    %c0_1 = arith.constant 0 : index
    %6 = vector.load %arg2[%5, %c0_1] : memref<2x16xi32, #tpu.memory_space<vmem>>, vector<2x16xi32>
    %c7_i32 = arith.constant 7 : i32
    %7 = vector.broadcast %c7_i32 : i32 to vector<2x16xi32>
    %8 = arith.shrsi %6, %7 : vector<2x16xi32>
    %c127_i32 = arith.constant 127 : i32
    %9 = vector.broadcast %c127_i32 : i32 to vector<2x16xi32>
    %10 = arith.andi %6, %9 : vector<2x16xi32>
    %11 = vector.shape_cast %10 : vector<2x16xi32> to vector<2x16x1xi32>
    %12 = tpu.iota {dimensions = array<i32: 2>} : vector<2x16x128xi32>
    %13 = vector.broadcast %11 : vector<2x16x1xi32> to vector<2x16x128xi32>
    %14 = arith.cmpi eq, %13, %12 : vector<2x16x128xi32>
    %15 = arith.extui %14 : vector<2x16x128xi1> to vector<2x16x128xi32>
    %16 = arith.sitofp %15 : vector<2x16x128xi32> to vector<2x16x128xf32>
    %17 = arith.truncf %16 : vector<2x16x128xf32> to vector<2x16x128xbf16>
    "tpu.trace_start"() <{level = 10 : i32, message = "slk,skn->sln"}> : () -> ()
    %cst = arith.constant dense<0.000000e+00> : vector<2x16x24xf32>
    %18 = tpu.matmul %17, %2, %cst {dimension_numbers = #tpu.dot_dimension_numbers<[2], [1], [1], [2], [0, 0, 0, 1, 1, 2], [0], [0]>} : vector<2x16x128xbf16>, vector<2x128x24xbf16>, vector<2x16x24xf32> -> vector<2x16x24xf32>
    "tpu.trace_stop"() : () -> ()
    %19 = vector.extract_strided_slice %18 {offsets = [0, 0, 0], sizes = [2, 16, 8], strides = [1, 1, 1]} : vector<2x16x24xf32> to vector<2x16x8xf32>
    %20 = vector.extract_strided_slice %18 {offsets = [0, 0, 8], sizes = [2, 16, 8], strides = [1, 1, 1]} : vector<2x16x24xf32> to vector<2x16x8xf32>
    %21 = arith.addf %19, %20 : vector<2x16x8xf32>
    %22 = vector.extract_strided_slice %18 {offsets = [0, 0, 16], sizes = [2, 16, 8], strides = [1, 1, 1]} : vector<2x16x24xf32> to vector<2x16x8xf32>
    %23 = arith.addf %21, %22 : vector<2x16x8xf32>
    %24 = vector.shape_cast %8 : vector<2x16xi32> to vector<2x16x1xi32>
    %25 = tpu.iota {dimensions = array<i32: 2>} : vector<2x16x8xi32>
    %26 = vector.broadcast %24 : vector<2x16x1xi32> to vector<2x16x8xi32>
    %27 = arith.cmpi eq, %26, %25 : vector<2x16x8xi32>
    %28 = arith.extui %27 : vector<2x16x8xi1> to vector<2x16x8xi32>
    %29 = arith.sitofp %28 : vector<2x16x8xi32> to vector<2x16x8xf32>
    %30 = arith.mulf %23, %29 : vector<2x16x8xf32>
    %cst_2 = arith.constant dense<0.000000e+00> : vector<2x16xf32>
    %31 = vector.multi_reduction <add>, %30, %cst_2 [2] : vector<2x16x8xf32> to vector<2x16xf32>
    %32 = arith.index_cast %4 : i32 to index
    %c0_3 = arith.constant 0 : index
    %33 = vector.load %arg3[%32, %c0_3] : memref<2x16xf32, #tpu.memory_space<vmem>>, vector<2x16xf32>
    %34 = arith.mulf %31, %33 : vector<2x16xf32>
    %35 = math.exp %34 : vector<2x16xf32>
    %36 = arith.index_cast %4 : i32 to index
    %c0_4 = arith.constant 0 : index
    %37 = vector.load %arg4[%36, %c0_4] : memref<2x16xf32, #tpu.memory_space<vmem>>, vector<2x16xf32>
    tpu.vector_store %arg4[%36, %c0_4], %35 {strides = array<i32>} : memref<2x16xf32, #tpu.memory_space<vmem>>, vector<2x16xf32>,
    %c1_i32 = arith.constant 1 : i32
    return
  }
  func.func @transform_0(%arg0: i32) -> (i32, i32) {
    %c0_i32 = arith.constant 0 : i32
    %c0_i32_0 = arith.constant 0 : i32
    %c0_i32_1 = arith.constant 0 : i32
    return %c0_i32, %c0_i32_0 : i32, i32
  }
  func.func @transform_1(%arg0: i32) -> (i32, i32) {
    %c0_i32 = arith.constant 0 : i32
    %c0_i32_0 = arith.constant 0 : i32
    return %arg0, %c0_i32 : i32, i32
  }
  func.func @transform_2(%arg0: i32) -> (i32, i32) {
    %c0_i32 = arith.constant 0 : i32
    %c0_i32_0 = arith.constant 0 : i32
    return %arg0, %c0_i32 : i32, i32
  }
  func.func @transform_3(%arg0: i32) -> (i32, i32) {
    %c0_i32 = arith.constant 0 : i32
    %c0_i32_0 = arith.constant 0 : i32
    return %arg0, %c0_i32 : i32, i32
  }
}

</mosaic_0001>

<llo_original>
// kernel: fivemer_forward.1
$region0: #{fivemer_forward.1}
  #allocation0 [shape = 'u32[]', space=smem, size = 0x4, offset = 0x4, fixed_abs, tag = 'smem constant byte address 0x4 - core index']
  #allocation1 [shape = 'u32[144,128]{1,0:T(1,128)}', space=vmem, size = 0x12000, scoped, tag = 'internal scratch']
  %s0 = inlined_call_operand.vmem [shape: bf16[128,24], index: 0, kind: input, shape index: {}]
  %s1 = inlined_call_operand.vmem [shape: s32[2,16], index: 1, kind: input, shape index: {}]
  %s2 = inlined_call_operand.vmem [shape: f32[2,16], index: 2, kind: input, shape index: {}]
  %s3 = inlined_call_operand.hbm [shape: f32[2,16], index: 3, kind: output, shape index: {}]
  %s4 = sld [smem:[#allocation0]]
  $region22: #{fivemer_forward.1} parent=0
    _
  %s6 = ssub.s32 1, %s4
  %s7 = scalar_select 0, %s6, %s4
  $region1: #{fivemer_forward.1} parent=0
    #allocation2 [shape = 'u8[1024]{0}', space=vmem, size = 0x400, scoped, tag = 'output window, operand 0, single buffered']
    #allocation3 [shape = 's32[1]{0}', space=sflag, size = 0x4, scoped, tag = 'scoped memory for fivemer_forward.1']
    %8 = vsyncpa [#allocation3], 0
    // Predicated region
    $region2: #{fivemer_forward.1} parent=1 // pred_check
      _
    $region3: #{fivemer_forward.1} parent=1 // pred_check_branch
      %10 = sbr.rel (0) target = $region5
    $region4: #{fivemer_forward.1} parent=1 // pred_region
      _
    $region5: #{fivemer_forward.1} parent=1 // pred_fallthru
      _
    // Predicated region
    $region6: #{fivemer_forward.1} parent=1 // pred_check
      _
    $region7: #{fivemer_forward.1} parent=1 // pred_check_branch
      %12 = sbr.rel (0) target = $region9
    $region8: #{fivemer_forward.1} parent=1 // pred_region
      _
    $region9: #{fivemer_forward.1} parent=1 // pred_fallthru
      _
    // Predicated region
    $region10: #{fivemer_forward.1} parent=1 // pred_check
      _
    $region11: #{fivemer_forward.1} parent=1 // pred_check_branch
      %14 = sbr.rel (0) target = $region13
    $region12: #{fivemer_forward.1} parent=1 // pred_region
      _
    $region13: #{fivemer_forward.1} parent=1 // pred_fallthru
      _
    %v16 = vld [vmem:[%s0] sm:$0xf]
    %v17 = vld [vmem:[%s0 + $0x4] sm:$0xf]
    %v18 = vld [vmem:[%s0 + $0x8] sm:$0xf]
    %v19 = vld [vmem:[%s0 + $0xc] sm:$0xf]
    %v20 = vld [vmem:[%s0 + $0x10] sm:$0xf]
    %v21 = vld [vmem:[%s0 + $0x14] sm:$0xf]
    %v22 = vld [vmem:[%s0 + $0x18] sm:$0xf]
    %v23 = vld [vmem:[%s0 + $0x1c] sm:$0xf]
    %v24 = vld [vmem:[%s0 + $0x20] sm:$0xf]
    %v25 = vld [vmem:[%s0 + $0x24] sm:$0xf]
    %v26 = vld [vmem:[%s0 + $0x28] sm:$0xf]
    %v27 = vld [vmem:[%s0 + $0x2c] sm:$0xf]
    %v28 = vld [vmem:[%s0 + $0x30] sm:$0xf]
    %v29 = vld [vmem:[%s0 + $0x34] sm:$0xf]
    %v30 = vld [vmem:[%s0 + $0x38] sm:$0xf]
    %v31 = vld [vmem:[%s0 + $0x3c] sm:$0xf]
    %v32 = vld [vmem:[%s1] sm:$0x3]
    %v33 = vshra.s32 %v32, 7
    %v34 = vand.u32 %v32, 127
    %v35 = vlaneseq
    %v36 = vshrl.u32 %v35, 7
    %v37 = vsub.s32 0, %v36
    %v38 = vrot.slane %v34, %v37
    %40 = vbcast.lane.b32.xlu0 %v38, 256
    %v41 = vpop.permute.xlu0 %40
    %s43 = sor.u32 256, 8
    %44 = vbcast.lane.b32.xlu0 %v38, %s43
    %v45 = vpop.permute.xlu0 %44
    %v46 = vlaneseq
    %v47 = vshrl.u32 %v46, 7
    %v48 = vsub.s32 1, %v47
    %v49 = vrot.slane %v34, %v48
    %51 = vbcast.lane.b32.xlu0 %v49, 256
    %v52 = vpop.permute.xlu0 %51
    %s54 = sor.u32 256, 8
    %55 = vbcast.lane.b32.xlu0 %v49, %s54
    %v56 = vpop.permute.xlu0 %55
    %v57 = vlaneseq
    %v58 = vand.u32 %v57, 127
    %vm59 = vcmp.eq.s32.totalorder %v41, %v58
    %vm60 = vcmp.eq.s32.totalorder %v45, %v58
    %vm61 = vcmp.eq.s32.totalorder %v52, %v58
    %vm62 = vcmp.eq.s32.totalorder %v56, %v58
    %v63 = vsel %vm59, 1, 0
    %v64 = vsel %vm60, 1, 0
    %v65 = vsel %vm61, 1, 0
    %v66 = vsel %vm62, 1, 0
    %v67 = vcvt.s32.f32 %v63
    %v68 = vcvt.s32.f32 %v64
    %v69 = vcvt.s32.f32 %v65
    %v70 = vcvt.s32.f32 %v66
    %v71 = vpack.c.bf16 %v68, %v67
    %v72 = vpack.c.bf16 %v70, %v69
    %v89 = vunpack.c.l.b16 %v16
    %v90 = vunpack.c.l.b16 %v17
    %v91 = vunpack.c.l.b16 %v18
    %v92 = vunpack.c.l.b16 %v19
    %v93 = vunpack.c.l.b16 %v20
    %v94 = vunpack.c.l.b16 %v21
    %v95 = vunpack.c.l.b16 %v22
    %v96 = vunpack.c.l.b16 %v23
    %v97 = vunpack.c.l.b16 %v24
    %v98 = vunpack.c.l.b16 %v25
    %v99 = vunpack.c.l.b16 %v26
    %v100 = vunpack.c.l.b16 %v27
    %v101 = vunpack.c.l.b16 %v28
    %v102 = vunpack.c.l.b16 %v29
    %v103 = vunpack.c.l.b16 %v30
    %v104 = vunpack.c.l.b16 %v31
    %v105 = vpack.c.b16 %v90, %v89
    %v106 = vpack.c.b16 %v92, %v91
    %v107 = vpack.c.b16 %v94, %v93
    %v108 = vpack.c.b16 %v96, %v95
    %v109 = vpack.c.b16 %v98, %v97
    %v110 = vpack.c.b16 %v100, %v99
    %v111 = vpack.c.b16 %v102, %v101
    %v112 = vpack.c.b16 %v104, %v103
    %121 = vmatprep.subr.bf16.mxu0 0
    %122 = vmatpush1.bf16.msra.mxu0 %v105
    %123 = vmatprep.subr.bf16.mxu0 0
    %124 = vmatpush1.bf16.msra.mxu0 %v106
    %125 = vmatprep.subr.bf16.mxu0 0
    %126 = vmatpush1.bf16.msra.mxu0 %v107
    %127 = vmatprep.subr.bf16.mxu0 0
    %128 = vmatpush1.bf16.msra.mxu0 %v108
    %129 = vmatprep.subr.bf16.mxu0 0
    %130 = vmatpush1.bf16.msra.mxu0 %v109
    %131 = vmatprep.subr.bf16.mxu0 0
    %132 = vmatpush1.bf16.msra.mxu0 %v110
    %133 = vmatprep.subr.bf16.mxu0 0
    %134 = vmatpush1.bf16.msra.mxu0 %v111
    %135 = vmatprep.subr.bf16.mxu0 0
    %136 = vmatpush1.bf16.msra.mxu0 %v112
    %137 = vmatprep.subr.bf16.mxu0 0
    %138 = vmatpush1.bf16.msra.mxu0 0
    %139 = vmatprep.subr.bf16.mxu0 0
    %140 = vmatpush1.bf16.msra.mxu0 0
    %141 = vmatprep.subr.bf16.mxu0 0
    %142 = vmatpush1.bf16.msra.mxu0 0
    %143 = vmatprep.subr.bf16.mxu0 0
    %144 = vmatpush1.bf16.msra.mxu0 0
    %145 = vmatprep.subr.bf16.mxu0 0
    %146 = vmatpush1.bf16.msra.mxu0 0
    %147 = vmatprep.subr.bf16.mxu0 0
    %148 = vmatpush1.bf16.msra.mxu0 0
    %149 = vmatprep.subr.bf16.mxu0 0
    %150 = vmatpush1.bf16.msra.mxu0 0
    %151 = vmatprep.subr.bf16.mxu0 0
    %152 = vmatpush1.bf16.msra.mxu0 0
    %153 = vmatprep.mubr.bf16.mxu0 0
    %154 = vmatmul.mubr.bf16.gmra.mrb[0].mxu0 %v71
    %v155 = vpop.f32.mrb[0].mxu0
    %v156 = vadd.f32 0.0, %v155
    %v157 = vpop.f32.mrb[0].mxu0
    %v158 = vpop.f32.mrb[0].mxu0
    %v159 = vadd.f32 0.0, %v158
    %v160 = vpop.f32.mrb[0].mxu0
    %161 = vdwg.mxu0
    %162 = vmatprep.subr.bf16.mxu0 0
    %163 = vmatpush1.bf16.msra.mxu0 %v105
    %164 = vmatprep.subr.bf16.mxu0 0
    %165 = vmatpush1.bf16.msra.mxu0 %v106
    %166 = vmatprep.subr.bf16.mxu0 0
    %167 = vmatpush1.bf16.msra.mxu0 %v107
    %168 = vmatprep.subr.bf16.mxu0 0
    %169 = vmatpush1.bf16.msra.mxu0 %v108
    %170 = vmatprep.subr.bf16.mxu0 0
    %171 = vmatpush1.bf16.msra.mxu0 %v109
    %172 = vmatprep.subr.bf16.mxu0 0
    %173 = vmatpush1.bf16.msra.mxu0 %v110
    %174 = vmatprep.subr.bf16.mxu0 0
    %175 = vmatpush1.bf16.msra.mxu0 %v111
    %176 = vmatprep.subr.bf16.mxu0 0
    %177 = vmatpush1.bf16.msra.mxu0 %v112
    %178 = vmatprep.subr.bf16.mxu0 0
    %179 = vmatpush1.bf16.msra.mxu0 0
    %180 = vmatprep.subr.bf16.mxu0 0
    %181 = vmatpush1.bf16.msra.mxu0 0
    %182 = vmatprep.subr.bf16.mxu0 0
    %183 = vmatpush1.bf16.msra.mxu0 0
    %184 = vmatprep.subr.bf16.mxu0 0
    %185 = vmatpush1.bf16.msra.mxu0 0
    %186 = vmatprep.subr.bf16.mxu0 0
    %187 = vmatpush1.bf16.msra.mxu0 0
    %188 = vmatprep.subr.bf16.mxu0 0
    %189 = vmatpush1.bf16.msra.mxu0 0
    %190 = vmatprep.subr.bf16.mxu0 0
    %191 = vmatpush1.bf16.msra.mxu0 0
    %192 = vmatprep.subr.bf16.mxu0 0
    %193 = vmatpush1.bf16.msra.mxu0 0
    %194 = vmatprep.mubr.bf16.mxu0 0
    %195 = vmatmul.mubr.bf16.gmra.mrb[0].mxu0 %v72
    %v196 = vpop.f32.mrb[0].mxu0
    %v197 = vadd.f32 0.0, %v196
    %v198 = vpop.f32.mrb[0].mxu0
    %v199 = vpop.f32.mrb[0].mxu0
    %v200 = vadd.f32 0.0, %v199
    %v201 = vpop.f32.mrb[0].mxu0
    %202 = vdwg.mxu0
    %207 = vrot.lane.b32.xlu0 %v156, 120
    %v208 = vpop.permute.xlu0 %207
    %209 = vrot.lane.b32.xlu0 %v159, 120
    %v210 = vpop.permute.xlu0 %209
    %211 = vrot.lane.b32.xlu0 %v197, 120
    %v212 = vpop.permute.xlu0 %211
    %213 = vrot.lane.b32.xlu0 %v200, 120
    %v214 = vpop.permute.xlu0 %213
    %v219 = vadd.f32 %v156, %v208
    %v220 = vadd.f32 %v159, %v210
    %v221 = vadd.f32 %v197, %v212
    %v222 = vadd.f32 %v200, %v214
    %223 = vrot.lane.b32.xlu0 %v156, 112
    %v224 = vpop.permute.xlu0 %223
    %225 = vrot.lane.b32.xlu0 %v159, 112
    %v226 = vpop.permute.xlu0 %225
    %227 = vrot.lane.b32.xlu0 %v197, 112
    %v228 = vpop.permute.xlu0 %227
    %229 = vrot.lane.b32.xlu0 %v200, 112
    %v230 = vpop.permute.xlu0 %229
    %v235 = vadd.f32 %v219, %v224
    %v236 = vadd.f32 %v220, %v226
    %v237 = vadd.f32 %v221, %v228
    %v238 = vadd.f32 %v222, %v230
    %v239 = vlaneseq
    %v240 = vshrl.u32 %v239, 7
    %v241 = vsub.s32 0, %v240
    %v242 = vrot.slane %v33, %v241
    %244 = vbcast.lane.b32.xlu0 %v242, 256
    %v245 = vpop.permute.xlu0 %244
    %s247 = sor.u32 256, 8
    %248 = vbcast.lane.b32.xlu0 %v242, %s247
    %v249 = vpop.permute.xlu0 %248
    %v250 = vlaneseq
    %v251 = vshrl.u32 %v250, 7
    %v252 = vsub.s32 1, %v251
    %v253 = vrot.slane %v33, %v252
    %255 = vbcast.lane.b32.xlu0 %v253, 256
    %v256 = vpop.permute.xlu0 %255
    %s258 = sor.u32 256, 8
    %259 = vbcast.lane.b32.xlu0 %v253, %s258
    %v260 = vpop.permute.xlu0 %259
    %vm261 = vcmp.eq.s32.totalorder %v245, %v58
    %vm262 = vcmp.eq.s32.totalorder %v249, %v58
    %vm263 = vcmp.eq.s32.totalorder %v256, %v58
    %vm264 = vcmp.eq.s32.totalorder %v260, %v58
    %v265 = vsel %vm261, 1, 0
    %v266 = vsel %vm262, 1, 0
    %v267 = vsel %vm263, 1, 0
    %v268 = vsel %vm264, 1, 0
    %v269 = vcvt.s32.f32 %v265
    %v270 = vcvt.s32.f32 %v266
    %v271 = vcvt.s32.f32 %v267
    %v272 = vcvt.s32.f32 %v268
    %v273 = vmul.f32 %v235, %v269
    %v274 = vmul.f32 %v236, %v270
    %v275 = vmul.f32 %v237, %v271
    %v276 = vmul.f32 %v238, %v272
    %vm277 = vcmask 64512
    %v278 = vsel %vm277, %v273, 0.0
    %279 = vadd.xlane.f32.xlu0 %v278
    %v280 = vpop.xlane.xlu0 %279
    %v281 = vsel %vm277, %v274, 0.0
    %282 = vadd.xlane.f32.xlu0 %v281
    %v283 = vpop.xlane.xlu0 %282
    %v284 = vsel %vm277, %v275, 0.0
    %285 = vadd.xlane.f32.xlu0 %v284
    %v286 = vpop.xlane.xlu0 %285
    %v287 = vsel %vm277, %v276, 0.0
    %288 = vadd.xlane.f32.xlu0 %v287
    %v289 = vpop.xlane.xlu0 %288
    %v290 = vld [vmem:[%s2] sm:$0x3]
    %v292 = vlaneseq
    %v293 = vshrl.u32 %v292, 7
    %v294 = vsub.s32 0, %v293
    %v295 = vrot.slane %v290, %v294
    %297 = vbcast.lane.b32.xlu0 %v295, 256
    %v298 = vpop.permute.xlu0 %297
    %s300 = sor.u32 256, 8
    %301 = vbcast.lane.b32.xlu0 %v295, %s300
    %v302 = vpop.permute.xlu0 %301
    %v303 = vlaneseq
    %v304 = vshrl.u32 %v303, 7
    %v305 = vsub.s32 1, %v304
    %v306 = vrot.slane %v290, %v305
    %308 = vbcast.lane.b32.xlu0 %v306, 256
    %v309 = vpop.permute.xlu0 %308
    %s311 = sor.u32 256, 8
    %312 = vbcast.lane.b32.xlu0 %v306, %s311
    %v313 = vpop.permute.xlu0 %312
    %v318 = vmul.f32 %v280, %v298
    %v319 = vmul.f32 %v283, %v302
    %v320 = vmul.f32 %v286, %v309
    %v321 = vmul.f32 %v289, %v313
    %v322 = vmul.f32 %v318, 1.442695
    %v323 = vpow.pop %v322
    %v324 = vmul.f32 %v319, 1.442695
    %v325 = vpow.pop %v324
    %v326 = vmul.f32 %v320, 1.442695
    %v327 = vpow.pop %v326
    %v328 = vmul.f32 %v321, 1.442695
    %v329 = vpow.pop %v328
    %334 = vset.pattern.permute.xlu0 0
    %335 = vperm.xlu0 %334, %v323
    %v336 = vpop.permute.xlu0 %335
    %337 = vset.pattern.permute.xlu0 0
    %338 = vperm.xlu0 %337, %v325
    %v339 = vpop.permute.xlu0 %338
    %340 = vset.pattern.permute.xlu0 0
    %341 = vperm.xlu0 %340, %v327
    %v342 = vpop.permute.xlu0 %341
    %343 = vset.pattern.permute.xlu0 0
    %344 = vperm.xlu0 %343, %v329
    %v345 = vpop.permute.xlu0 %344
    %v346 = vlaneseq
    %v347 = vshrl.u32 %v346, 7
    %v348 = vsub.s32 %v58, %v347
    %v349 = vrot.slane %v336, %v348
    %v350 = vadd.s32 %v58, 4294967288
    %v351 = vlaneseq
    %v352 = vshrl.u32 %v351, 7
    %v353 = vsub.s32 %v350, %v352
    %v354 = vrot.slane %v339, %v353
    %vm355 = vcmask 130112
    %v356 = vsel %vm355, %v354, %v349
    %v357 = vlaneseq
    %v358 = vshrl.u32 %v357, 7
    %v359 = vsub.s32 %v58, %v358
    %v360 = vrot.slane %v342, %v359
    %v361 = vlaneseq
    %v362 = vshrl.u32 %v361, 7
    %v363 = vsub.s32 %v350, %v362
    %v364 = vrot.slane %v345, %v363
    %v365 = vsel %vm355, %v364, %v360
    %vm366 = vcmask 1041409
    %v367 = vsel %vm366, %v365, %v356
    %vm369 = vcmask 123904
    %370 = vst.msk [vmem:[#allocation2] sm:$0x3] %vm369, %v367
    // Predicated region
    $region14: #{fivemer_forward.1} parent=1 // pred_check
      _
    $region15: #{fivemer_forward.1} parent=1 // pred_check_branch
      %372 = sbr.rel (0) target = $region17
    $region16: #{fivemer_forward.1} parent=1 // pred_region
      %s374 = ssub.s32 32, 32
      %375 = vsyncadd [#allocation3], %s374
      %s377 = sshll.u32 [#allocation2], 4
      %s378 = int_to_ptr.vmem [resolvable:$true] %s377
      %380 = dma.vmem_to_hbm [thread:$0]  %s378, 32, %s3, [#allocation3]
    $region17: #{fivemer_forward.1} parent=1 // pred_fallthru
      _
    // Predicated region
    $region18: #{fivemer_forward.1} parent=1 // pred_check
      _
    $region19: #{fivemer_forward.1} parent=1 // pred_check_branch
      %382 = sbr.rel (0) target = $region21
    $region20: #{fivemer_forward.1} parent=1 // pred_region
      %383 = dma.done [#allocation3], 32
    $region21: #{fivemer_forward.1} parent=1 // pred_fallthru
      _
    %384 = vsyncpa [#allocation3], 1

</llo_original>
